<compile_context>
chip_gen: v7x
topology: tpu7x:2x2x1
jax: 0.10.0
libtpu: 0.0.40
codegen_flags: <defaults>
</compile_context>

<pallas_src>
import jax
import jax.numpy as jnp
from jax import lax
from jax.experimental import pallas as pl
from jax.experimental.pallas import tpu as pltpu


def _round_up(v, m):
    return ((v + m - 1) // m) * m


def _chip_info():
    """Return (is_tpu, generation). Robust to CPU / interpret-mode runs."""
    try:
        d = jax.devices()[0]
        if d.platform != "tpu":
            return False, 0
        kind = d.device_kind.lower()
        for g in (7, 6, 5, 4):
            if (f"v{g}" in kind) or (f"tpu{g}" in kind):
                return True, g
        return True, 0
    except Exception:
        return False, 0


def bbb_conv_kernel(pt_ref, wmu_ref, wvar_ref, bmu_ref, bvar_ref, eps_ref,
                    out_ref):
    # pt_ref   : (Kp, tm)  bf16  im2col patches, transposed (P on lane axis)
    # wmu_ref  : (Cp, Kp)  bf16  posterior mean weights (grid-invariant)
    # wvar_ref : (Cp, Kp)  bf16  softplus(W_rho)^2, precomputed in wrapper
    # bmu_ref  : (Cp, 1)   f32   bias mean
    # bvar_ref : (Cp, 1)   f32   softplus(bias_rho)^2
    # eps_ref  : (Cp, tm)  bf16  standard-normal noise (host-generated)
    # out_ref  : (Cp, tm)  f32   sampled activations (transposed layout)
    p = pt_ref[...]                     # bf16 tile
    p_sq = p * p                        # square directly in bf16 (VPU)

    # mean path:  W_mu @ x + bias_mu     (f32 MXU accumulation)
    act_mu = jnp.dot(wmu_ref[...], p,
                     preferred_element_type=jnp.float32) + bmu_ref[...]
    # variance path: 1e-16 + softplus(W_rho)^2 @ x^2 + bias_sigma^2
    act_var = (1e-16
               + jnp.dot(wvar_ref[...], p_sq,
                         preferred_element_type=jnp.float32)
               + bvar_ref[...])
    act_std = jnp.sqrt(act_var)

    out_ref[...] = act_mu + act_std * eps_ref[...].astype(jnp.float32)


def im2col_nchw_t(x, kh, kw, stride, padding, dilation):
    """Extract conv patches; returns [Cin*kh*kw, N*OH*OW] (K-major layout
    matches PyTorch OIHW weight flattening, P ordering is (N, OH, OW))."""
    n, c, h, w = x.shape
    oh = (h + 2 * padding - dilation * (kh - 1) - 1) // stride + 1
    ow = (w + 2 * padding - dilation * (kw - 1) - 1) // stride + 1
    xp = jnp.pad(x, ((0, 0), (0, 0), (padding, padding), (padding, padding)))
    cols = []
    for i in range(kh):
        for j in range(kw):
            hi = i * dilation
            wj = j * dilation
            cols.append(xp[:, :,
                           hi: hi + (oh - 1) * stride + 1: stride,
                           wj: wj + (ow - 1) * stride + 1: stride])
    pat = jnp.stack(cols, axis=2)                  # [N, C, kh*kw, OH, OW]
    pat = pat.transpose(1, 2, 0, 3, 4)             # [C, kh*kw, N, OH, OW]
    pat = pat.reshape(c * kh * kw, n * oh * ow)    # [K, P]
    return pat, oh, ow


def bbb_lrt_conv2d(x, w_mu, w_rho, b_mu, b_rho, eps_key,
                   stride=1, padding=0, dilation=1, tm=None):
    """Forward pass of BBB_LRT_Conv2d (sample=True).  x is NCHW float32.
    Returns (out_nchw, eps_nchw); eps is returned for validation only."""
    n, cin, h, w = x.shape
    cout, cin_w, kh, kw = w_mu.shape
    assert cin == cin_w

    is_tpu, gen = _chip_info()

    patches_t, oh, ow = im2col_nchw_t(x, kh, kw, stride, padding, dilation)
    k, p_rows = patches_t.shape

    # K (contraction) padding: 128 lanes minimum; 256 on v6e/v7x when the
    # native K is large enough to feed the full 256-wide MXU.
    k_align = 256 if (is_tpu and gen >= 6 and k > 128) else 128
    k_pad = _round_up(k, k_align)
    # Cout pads only to the sublane granule (16 covers bf16 packing & f32).
    c_pad = _round_up(cout, 16)

    # ---- tile / VMEM budgeting ------------------------------------------
    phys_vmem = (64 << 20) if (is_tpu and gen >= 7) else (128 << 20)
    budget = (phys_vmem * 3) // 4
    if tm is None:
        tm = 512 if (is_tpu and gen >= 7) else 1024   # bigger tiles on 128MiB parts
    tm = max(128, tm)

    p_aligned = _round_up(p_rows, 128)
    while tm > 128 and tm // 2 >= p_aligned:          # don't vastly exceed P
        tm //= 2
    if is_tpu and gen >= 7:
        # 2 TensorCores: need >= 2 "parallel" grid steps to use both.
        while tm > 128 and pl.cdiv(p_rows, tm) < 2:
            tm //= 2

    def _vmem_bytes(tm_):
        return (2 * tm_ * k_pad * 2        # patches bf16, double-buffered
                + 2 * tm_ * c_pad * 2      # eps bf16, double-buffered
                + 2 * tm_ * c_pad * 4      # out f32, double-buffered
                + 2 * 2 * c_pad * k_pad * 2  # two weight mats (double-buffered)
                + 2 * 2 * c_pad * 4)       # biases

    while tm > 128 and _vmem_bytes(tm) > budget:
        tm //= 2

    p_pad = _round_up(p_rows, tm)
    grid = (p_pad // tm,)
    vmem_limit = int(min(budget, max(32 << 20, 2 * _vmem_bytes(tm))))

    # ---- operand preparation (grid-invariant transforms hoisted here) ----
    patches_t = jnp.pad(patches_t, ((0, k_pad - k), (0, p_pad - p_rows)))
    patches_t = patches_t.astype(jnp.bfloat16)

    w_sigma = jax.nn.softplus(w_rho)
    w_mu_mat = jnp.pad(w_mu.reshape(cout, k),
                       ((0, c_pad - cout), (0, k_pad - k))).astype(jnp.bfloat16)
    w_var_mat = jnp.pad((w_sigma * w_sigma).reshape(cout, k),
                        ((0, c_pad - cout), (0, k_pad - k))).astype(jnp.bfloat16)
    b_sigma = jax.nn.softplus(b_rho)
    b_mu_mat = jnp.pad(b_mu, (0, c_pad - cout)).reshape(c_pad, 1).astype(jnp.float32)
    b_var_mat = jnp.pad(b_sigma * b_sigma,
                        (0, c_pad - cout)).reshape(c_pad, 1).astype(jnp.float32)

    # Host-side standard normal noise (bf16 input stream; the exact bf16
    # values are reused by the reference so the check is noise-exact).
    eps_bf16 = jax.random.normal(eps_key, (cout, p_rows),
                                 dtype=jnp.float32).astype(jnp.bfloat16)
    eps_mat = jnp.pad(eps_bf16, ((0, c_pad - cout), (0, p_pad - p_rows)))

    out_t = pl.pallas_call(
        bbb_conv_kernel,
        out_shape=jax.ShapeDtypeStruct((c_pad, p_pad), jnp.float32),
        grid=grid,
        in_specs=[
            pl.BlockSpec((k_pad, tm), lambda i: (0, i)),     # patches_T tile
            pl.BlockSpec((c_pad, k_pad), lambda i: (0, 0)),  # W_mu
            pl.BlockSpec((c_pad, k_pad), lambda i: (0, 0)),  # W_var
            pl.BlockSpec((c_pad, 1), lambda i: (0, 0)),      # bias_mu
            pl.BlockSpec((c_pad, 1), lambda i: (0, 0)),      # bias_var
            pl.BlockSpec((c_pad, tm), lambda i: (0, i)),     # eps tile
        ],
        out_specs=pl.BlockSpec((c_pad, tm), lambda i: (0, i)),
        compiler_params=pltpu.CompilerParams(
            dimension_semantics=("parallel",),
            vmem_limit_bytes=vmem_limit),
    )(patches_t, w_mu_mat, w_var_mat, b_mu_mat, b_var_mat, eps_mat)

    # [Cout, P] -> [Cout, N, OH, OW] -> NCHW (module contract is NCHW).
    out = out_t[:cout, :p_rows].reshape(cout, n, oh, ow).transpose(1, 0, 2, 3)
    eps_nchw = (eps_bf16.astype(jnp.float32)
                .reshape(cout, n, oh, ow).transpose(1, 0, 2, 3))
    return out, eps_nchw


def reference_forward(x, w_mu, w_rho, b_mu, b_rho, eps_nchw,
                      stride, padding, dilation):
    """Pure-JAX reference matching the PyTorch forward (sample=True)."""
    dn = ('NCHW', 'OIHW', 'NCHW')
    w_sigma = jnp.log1p(jnp.exp(w_rho))
    b_sigma = jnp.log1p(jnp.exp(b_rho))
    act_mu = lax.conv_general_dilated(
        x, w_mu, (stride, stride), [(padding, padding)] * 2,
        rhs_dilation=(dilation, dilation), dimension_numbers=dn)
    act_mu = act_mu + b_mu[None, :, None, None]
    act_var = 1e-16 + lax.conv_general_dilated(
        x * x, w_sigma * w_sigma, (stride, stride), [(padding, padding)] * 2,
        rhs_dilation=(dilation, dilation), dimension_numbers=dn)
    act_var = act_var + (b_sigma * b_sigma)[None, :, None, None]
    return act_mu + jnp.sqrt(act_var) * eps_nchw


if __name__ == "__main__":
    # Module config (small): Conv2d(in=4, out=8, kernel=3, stride=1, pad=1)
    in_channels, out_channels, ksize = 4, 8, 3
    stride, padding, dilation = 1, 1, 1
    N, H, W = 2, 16, 16

    key = jax.random.PRNGKey(0)
    kx, kwm, kwr, kbm, kbr, keps = jax.random.split(key, 6)

    # posterior_mu_initial = (0, 0.1); posterior_rho_initial = (-3, 0.1)
    x = jax.random.normal(kx, (N, in_channels, H, W), dtype=jnp.float32)
    W_mu = 0.0 + 0.1 * jax.random.normal(
        kwm, (out_channels, in_channels, ksize, ksize), dtype=jnp.float32)
    W_rho = -3.0 + 0.1 * jax.random.normal(
        kwr, (out_channels, in_channels, ksize, ksize), dtype=jnp.float32)
    bias_mu = 0.0 + 0.1 * jax.random.normal(kbm, (out_channels,), jnp.float32)
    bias_rho = -3.0 + 0.1 * jax.random.normal(kbr, (out_channels,), jnp.float32)

    out, eps_nchw = bbb_lrt_conv2d(
        x, W_mu, W_rho, bias_mu, bias_rho, keps,
        stride=stride, padding=padding, dilation=dilation)
    out = jax.block_until_ready(out)

    # Verify against a pure-JAX reference using the exact eps the kernel used.
    OH = (H + 2 * padding - dilation * (ksize - 1) - 1) // stride + 1
    OW = (W + 2 * padding - dilation * (ksize - 1) - 1) // stride + 1
    ref = reference_forward(x, W_mu, W_rho, bias_mu, bias_rho, eps_nchw,
                            stride, padding, dilation)
    assert out.shape == (N, out_channels, OH, OW)
    # bf16 MXU inputs (patches/weights) vs. f32 reference -> loosened tolerance.
    max_err = float(jnp.max(jnp.abs(out - ref)))
    assert jnp.allclose(out, ref, atol=5e-2, rtol=5e-2), max_err

    print("KERNEL_OK")
</pallas_src>

<mosaic_0001>
module attributes {stable_mosaic.version = 11 : i64} {
  func.func @bbb_conv_kernel(%arg0: i32, %arg1: memref<128x512xbf16, #tpu.memory_space<vmem>>, %arg2: memref<16x128xbf16, #tpu.memory_space<vmem>>, %arg3: memref<16x128xbf16, #tpu.memory_space<vmem>>, %arg4: memref<16x1xf32, #tpu.memory_space<vmem>>, %arg5: memref<16x1xf32, #tpu.memory_space<vmem>>, %arg6: memref<16x512xbf16, #tpu.memory_space<vmem>>, %arg7: memref<16x512xf32, #tpu.memory_space<vmem>>) attributes {dimension_semantics = [#tpu.dimension_semantics<parallel>], iteration_bounds = array<i64: 1>, scalar_prefetch = 0 : i64, scratch_operands = 0 : i64, tpu.core_type = #tpu.core_type<tc>, window_params = [{transform_indices = @transform_0, window_bounds = array<i64: 128, 512>}, {pipeline_mode = #tpu.pipeline_mode<synchronous>, transform_indices = @transform_1, window_bounds = array<i64: 16, 128>}, {pipeline_mode = #tpu.pipeline_mode<synchronous>, transform_indices = @transform_2, window_bounds = array<i64: 16, 128>}, {pipeline_mode = #tpu.pipeline_mode<synchronous>, transform_indices = @transform_3, window_bounds = array<i64: 16, 1>}, {pipeline_mode = #tpu.pipeline_mode<synchronous>, transform_indices = @transform_4, window_bounds = array<i64: 16, 1>}, {transform_indices = @transform_5, window_bounds = array<i64: 16, 512>}, {transform_indices = @transform_6, window_bounds = array<i64: 16, 512>}]} {
    %c0 = arith.constant 0 : index
    %c0_0 = arith.constant 0 : index
    %0 = vector.load %arg1[%c0, %c0_0] : memref<128x512xbf16, #tpu.memory_space<vmem>>, vector<128x512xbf16>
    %1 = arith.mulf %0, %0 : vector<128x512xbf16>
    %c0_1 = arith.constant 0 : index
    %c0_2 = arith.constant 0 : index
    %2 = vector.load %arg2[%c0_1, %c0_2] : memref<16x128xbf16, #tpu.memory_space<vmem>>, vector<16x128xbf16>
    %cst = arith.constant dense<0.000000e+00> : vector<16x512xf32>
    %3 = tpu.matmul %2, %0, %cst {dimension_numbers = #tpu.dot_dimension_numbers<[1], [0], [0], [1], [0, 0, 1, 1], [], []>} : vector<16x128xbf16>, vector<128x512xbf16>, vector<16x512xf32> -> vector<16x512xf32>
    %c0_3 = arith.constant 0 : index
    %c0_4 = arith.constant 0 : index
    %4 = vector.load %arg4[%c0_3, %c0_4] : memref<16x1xf32, #tpu.memory_space<vmem>>, vector<16x1xf32>
    %5 = vector.broadcast %4 : vector<16x1xf32> to vector<16x512xf32>
    %6 = arith.addf %3, %5 : vector<16x512xf32>
    %c0_5 = arith.constant 0 : index
    %c0_6 = arith.constant 0 : index
    %7 = vector.load %arg3[%c0_5, %c0_6] : memref<16x128xbf16, #tpu.memory_space<vmem>>, vector<16x128xbf16>
    %cst_7 = arith.constant dense<0.000000e+00> : vector<16x512xf32>
    %8 = tpu.matmul %7, %1, %cst_7 {dimension_numbers = #tpu.dot_dimension_numbers<[1], [0], [0], [1], [0, 0, 1, 1], [], []>} : vector<16x128xbf16>, vector<128x512xbf16>, vector<16x512xf32> -> vector<16x512xf32>
    %cst_8 = arith.constant 1.000000e-16 : f32
    %9 = vector.broadcast %cst_8 : f32 to vector<16x512xf32>
    %10 = arith.addf %9, %8 : vector<16x512xf32>
    %c0_9 = arith.constant 0 : index
    %c0_10 = arith.constant 0 : index
    %11 = vector.load %arg5[%c0_9, %c0_10] : memref<16x1xf32, #tpu.memory_space<vmem>>, vector<16x1xf32>
    %12 = vector.broadcast %11 : vector<16x1xf32> to vector<16x512xf32>
    %13 = arith.addf %10, %12 : vector<16x512xf32>
    %14 = math.sqrt %13 : vector<16x512xf32>
    %c0_11 = arith.constant 0 : index
    %c0_12 = arith.constant 0 : index
    %15 = vector.load %arg6[%c0_11, %c0_12] : memref<16x512xbf16, #tpu.memory_space<vmem>>, vector<16x512xbf16>
    %16 = arith.extf %15 : vector<16x512xbf16> to vector<16x512xf32>
    %17 = arith.mulf %14, %16 : vector<16x512xf32>
    %18 = arith.addf %6, %17 : vector<16x512xf32>
    %c0_13 = arith.constant 0 : index
    %c0_14 = arith.constant 0 : index
    %19 = vector.load %arg7[%c0_13, %c0_14] : memref<16x512xf32, #tpu.memory_space<vmem>>, vector<16x512xf32>
    tpu.vector_store %arg7[%c0_13, %c0_14], %18 {strides = array<i32>} : memref<16x512xf32, #tpu.memory_space<vmem>>, vector<16x512xf32>,
    return
  }
  func.func @transform_0(%arg0: i32) -> (i32, i32) {
    %c0_i32 = arith.constant 0 : i32
    %c0_i32_0 = arith.constant 0 : i32
    return %c0_i32, %arg0 : i32, i32
  }
  func.func @transform_1(%arg0: i32) -> (i32, i32) {
    %c0_i32 = arith.constant 0 : i32
    %c0_i32_0 = arith.constant 0 : i32
    %c0_i32_1 = arith.constant 0 : i32
    return %c0_i32, %c0_i32_0 : i32, i32
  }
  func.func @transform_2(%arg0: i32) -> (i32, i32) {
    %c0_i32 = arith.constant 0 : i32
    %c0_i32_0 = arith.constant 0 : i32
    %c0_i32_1 = arith.constant 0 : i32
    return %c0_i32, %c0_i32_0 : i32, i32
  }
  func.func @transform_3(%arg0: i32) -> (i32, i32) {
    %c0_i32 = arith.constant 0 : i32
    %c0_i32_0 = arith.constant 0 : i32
    %c0_i32_1 = arith.constant 0 : i32
    return %c0_i32, %c0_i32_0 : i32, i32
  }
  func.func @transform_4(%arg0: i32) -> (i32, i32) {
    %c0_i32 = arith.constant 0 : i32
    %c0_i32_0 = arith.constant 0 : i32
    %c0_i32_1 = arith.constant 0 : i32
    return %c0_i32, %c0_i32_0 : i32, i32
  }
  func.func @transform_5(%arg0: i32) -> (i32, i32) {
    %c0_i32 = arith.constant 0 : i32
    %c0_i32_0 = arith.constant 0 : i32
    return %c0_i32, %arg0 : i32, i32
  }
  func.func @transform_6(%arg0: i32) -> (i32, i32) {
    %c0_i32 = arith.constant 0 : i32
    %c0_i32_0 = arith.constant 0 : i32
    return %c0_i32, %arg0 : i32, i32
  }
}

</mosaic_0001>

<llo_original>
// kernel: tpu_custom_call.1
$region0: #{tpu_custom_call.1}
  #allocation0 [shape = 'u32[]', space=smem, size = 0x4, offset = 0x4, fixed_abs, tag = 'smem constant byte address 0x4 - core index']
  #allocation1 [shape = 'u32[144,128]{1,0:T(1,128)}', space=vmem, size = 0x12000, scoped, tag = 'internal scratch']
  %s0 = inlined_call_operand.hbm [shape: bf16[128,512], index: 0, kind: input, shape index: {}]
  %s1 = inlined_call_operand.vmem [shape: bf16[16,128], index: 1, kind: input, shape index: {}]
  %s2 = inlined_call_operand.vmem [shape: bf16[16,128], index: 2, kind: input, shape index: {}]
  %s3 = inlined_call_operand.vmem [shape: f32[16,1], index: 3, kind: input, shape index: {}]
  %s4 = inlined_call_operand.vmem [shape: f32[16,1], index: 4, kind: input, shape index: {}]
  %s5 = inlined_call_operand.vmem [shape: bf16[16,512], index: 5, kind: input, shape index: {}]
  %s6 = inlined_call_operand.hbm [shape: f32[16,512], index: 6, kind: output, shape index: {}]
  %s7 = sld [smem:[#allocation0]]
  $region38: #{tpu_custom_call.1} parent=0
    _
  %s9 = ssub.s32 1, %s7
  %s10 = scalar_select 0, %s9, %s7
  $region1: #{tpu_custom_call.1} parent=0
    #allocation2 [shape = 'u8[131072]{0}', space=vmem, size = 0x20000, scoped, tag = 'input window, operand 0, single buffered']
    #allocation3 [shape = 's32[1]{0}', space=sflag, size = 0x4, scoped, tag = 'scoped memory for tpu_custom_call.1']
    #allocation4 [shape = 's32[1]{0}', space=sflag, size = 0x4, scoped, tag = 'scoped memory for tpu_custom_call.1']
    #allocation5 [shape = 'u8[32768]{0}', space=vmem, size = 0x8000, scoped, tag = 'output window, operand 0, single buffered']
    %11 = vsyncpa [#allocation3], 0
    %12 = vsyncpa [#allocation4], 0
    // Predicated region
    $region2: #{tpu_custom_call.1} parent=1 // pred_check
      _
    $region3: #{tpu_custom_call.1} parent=1 // pred_check_branch
      %14 = sbr.rel (0) target = $region5
    $region4: #{tpu_custom_call.1} parent=1 // pred_region
      %s16 = ssub.s32 4096, 4096
      %17 = vsyncadd [#allocation3], %s16
      %s18 = sshll.u32 [#allocation2], 4
      %s19 = int_to_ptr.vmem [resolvable:$true] %s18
      %24 = dma.hbm_to_vmem [thread:$0]  %s0, 4096, %s19, [#allocation3], 256, 256, 16
    $region5: #{tpu_custom_call.1} parent=1 // pred_fallthru
      _
    // Predicated region
    $region6: #{tpu_custom_call.1} parent=1 // pred_check
      _
    $region7: #{tpu_custom_call.1} parent=1 // pred_check_branch
      %26 = sbr.rel (0) target = $region9
    $region8: #{tpu_custom_call.1} parent=1 // pred_region
      _
    $region9: #{tpu_custom_call.1} parent=1 // pred_fallthru
      _
    // Predicated region
    $region10: #{tpu_custom_call.1} parent=1 // pred_check
      _
    $region11: #{tpu_custom_call.1} parent=1 // pred_check_branch
      %28 = sbr.rel (0) target = $region13
    $region12: #{tpu_custom_call.1} parent=1 // pred_region
      _
    $region13: #{tpu_custom_call.1} parent=1 // pred_fallthru
      _
    // Predicated region
    $region14: #{tpu_custom_call.1} parent=1 // pred_check
      _
    $region15: #{tpu_custom_call.1} parent=1 // pred_check_branch
      %30 = sbr.rel (0) target = $region17
    $region16: #{tpu_custom_call.1} parent=1 // pred_region
      _
    $region17: #{tpu_custom_call.1} parent=1 // pred_fallthru
      _
    // Predicated region
    $region18: #{tpu_custom_call.1} parent=1 // pred_check
      _
    $region19: #{tpu_custom_call.1} parent=1 // pred_check_branch
      %32 = sbr.rel (0) target = $region21
    $region20: #{tpu_custom_call.1} parent=1 // pred_region
      _
    $region21: #{tpu_custom_call.1} parent=1 // pred_fallthru
      _
    // Predicated region
    $region22: #{tpu_custom_call.1} parent=1 // pred_check
      _
    $region23: #{tpu_custom_call.1} parent=1 // pred_check_branch
      %34 = sbr.rel (0) target = $region25
    $region24: #{tpu_custom_call.1} parent=1 // pred_region
      _
    $region25: #{tpu_custom_call.1} parent=1 // pred_fallthru
      _
    // Predicated region
    $region26: #{tpu_custom_call.1} parent=1 // pred_check
      _
    $region27: #{tpu_custom_call.1} parent=1 // pred_check_branch
      %36 = sbr.rel (0) target = $region29
    $region28: #{tpu_custom_call.1} parent=1 // pred_region
      %37 = dma.done [#allocation3], 4096
    $region29: #{tpu_custom_call.1} parent=1 // pred_fallthru
      _
    %v39 = vld [vmem:[#allocation2] sm:$0xff]
    %v40 = vld [vmem:[#allocation2 + $0x8] sm:$0xff]
    %v41 = vld [vmem:[#allocation2 + $0x10] sm:$0xff]
    %v42 = vld [vmem:[#allocation2 + $0x18] sm:$0xff]
    %v43 = vld [vmem:[#allocation2 + $0x20] sm:$0xff]
    %v44 = vld [vmem:[#allocation2 + $0x28] sm:$0xff]
    %v45 = vld [vmem:[#allocation2 + $0x30] sm:$0xff]
    %v46 = vld [vmem:[#allocation2 + $0x38] sm:$0xff]
    %v47 = vld [vmem:[#allocation2 + $0x40] sm:$0xff]
    %v48 = vld [vmem:[#allocation2 + $0x48] sm:$0xff]
    %v49 = vld [vmem:[#allocation2 + $0x50] sm:$0xff]
    %v50 = vld [vmem:[#allocation2 + $0x58] sm:$0xff]
    %v51 = vld [vmem:[#allocation2 + $0x60] sm:$0xff]
    %v52 = vld [vmem:[#allocation2 + $0x68] sm:$0xff]
    %v53 = vld [vmem:[#allocation2 + $0x70] sm:$0xff]
    %v54 = vld [vmem:[#allocation2 + $0x78] sm:$0xff]
    %v55 = vld [vmem:[#allocation2 + $0x80] sm:$0xff]
    %v56 = vld [vmem:[#allocation2 + $0x88] sm:$0xff]
    %v57 = vld [vmem:[#allocation2 + $0x90] sm:$0xff]
    %v58 = vld [vmem:[#allocation2 + $0x98] sm:$0xff]
    %v59 = vld [vmem:[#allocation2 + $0xa0] sm:$0xff]
    %v60 = vld [vmem:[#allocation2 + $0xa8] sm:$0xff]
    %v61 = vld [vmem:[#allocation2 + $0xb0] sm:$0xff]
    %v62 = vld [vmem:[#allocation2 + $0xb8] sm:$0xff]
    %v63 = vld [vmem:[#allocation2 + $0xc0] sm:$0xff]
    %v64 = vld [vmem:[#allocation2 + $0xc8] sm:$0xff]
    %v65 = vld [vmem:[#allocation2 + $0xd0] sm:$0xff]
    %v66 = vld [vmem:[#allocation2 + $0xd8] sm:$0xff]
    %v67 = vld [vmem:[#allocation2 + $0xe0] sm:$0xff]
    %v68 = vld [vmem:[#allocation2 + $0xe8] sm:$0xff]
    %v69 = vld [vmem:[#allocation2 + $0xf0] sm:$0xff]
    %v70 = vld [vmem:[#allocation2 + $0xf8] sm:$0xff]
    %v71 = vmul.bf16 %v39, %v39
    %v72 = vmul.bf16 %v40, %v40
    %v73 = vmul.bf16 %v41, %v41
    %v74 = vmul.bf16 %v42, %v42
    %v75 = vmul.bf16 %v43, %v43
    %v76 = vmul.bf16 %v44, %v44
    %v77 = vmul.bf16 %v45, %v45
    %v78 = vmul.bf16 %v46, %v46
    %v79 = vmul.bf16 %v47, %v47
    %v80 = vmul.bf16 %v48, %v48
    %v81 = vmul.bf16 %v49, %v49
    %v82 = vmul.bf16 %v50, %v50
    %v83 = vmul.bf16 %v51, %v51
    %v84 = vmul.bf16 %v52, %v52
    %v85 = vmul.bf16 %v53, %v53
    %v86 = vmul.bf16 %v54, %v54
    %v87 = vmul.bf16 %v55, %v55
    %v88 = vmul.bf16 %v56, %v56
    %v89 = vmul.bf16 %v57, %v57
    %v90 = vmul.bf16 %v58, %v58
    %v91 = vmul.bf16 %v59, %v59
    %v92 = vmul.bf16 %v60, %v60
    %v93 = vmul.bf16 %v61, %v61
    %v94 = vmul.bf16 %v62, %v62
    %v95 = vmul.bf16 %v63, %v63
    %v96 = vmul.bf16 %v64, %v64
    %v97 = vmul.bf16 %v65, %v65
    %v98 = vmul.bf16 %v66, %v66
    %v99 = vmul.bf16 %v67, %v67
    %v100 = vmul.bf16 %v68, %v68
    %v101 = vmul.bf16 %v69, %v69
    %v102 = vmul.bf16 %v70, %v70
    %v103 = vld [vmem:[%s1] sm:$0xf]
    %v104 = vld [vmem:[%s1 + $0x4] sm:$0xf]
    %v105 = vld [vmem:[%s3] sm:$0xff]
    %v106 = vld [vmem:[%s3 + $0x8] sm:$0xff]
    %108 = vset.pattern.permute.xlu0 0
    %109 = vperm.xlu0 %108, %v105
    %v110 = vpop.permute.xlu0 %109
    %113 = vset.pattern.permute.xlu0 0
    %114 = vperm.xlu0 %113, %v106
    %v115 = vpop.permute.xlu0 %114
    %v119 = vunpack.c.l.b16 %v103
    %v120 = vunpack.c.l.b16 %v104
    %v121 = vpack.c.b16 %v120, %v119
    %v155 = vunpack.c.l.b16 %v39
    %v156 = vunpack.c.h.b16 %v39
    %v157 = vunpack.c.l.b16 %v40
    %v158 = vunpack.c.h.b16 %v40
    %v159 = vunpack.c.l.b16 %v41
    %v160 = vunpack.c.h.b16 %v41
    %v161 = vunpack.c.l.b16 %v42
    %v162 = vunpack.c.h.b16 %v42
    %v163 = vunpack.c.l.b16 %v43
    %v164 = vunpack.c.h.b16 %v43
    %v165 = vunpack.c.l.b16 %v44
    %v166 = vunpack.c.h.b16 %v44
    %v167 = vunpack.c.l.b16 %v45
    %v168 = vunpack.c.h.b16 %v45
    %v169 = vunpack.c.l.b16 %v46
    %v170 = vunpack.c.h.b16 %v46
    %v171 = vunpack.c.l.b16 %v47
    %v172 = vunpack.c.h.b16 %v47
    %v173 = vunpack.c.l.b16 %v48
    %v174 = vunpack.c.h.b16 %v48
    %v175 = vunpack.c.l.b16 %v49
    %v176 = vunpack.c.h.b16 %v49
    %v177 = vunpack.c.l.b16 %v50
    %v178 = vunpack.c.h.b16 %v50
    %v179 = vunpack.c.l.b16 %v51
    %v180 = vunpack.c.h.b16 %v51
    %v181 = vunpack.c.l.b16 %v52
    %v182 = vunpack.c.h.b16 %v52
    %v183 = vunpack.c.l.b16 %v53
    %v184 = vunpack.c.h.b16 %v53
    %v185 = vunpack.c.l.b16 %v54
    %v186 = vunpack.c.h.b16 %v54
    %v187 = vunpack.c.l.b16 %v55
    %v188 = vunpack.c.h.b16 %v55
    %v189 = vunpack.c.l.b16 %v56
    %v190 = vunpack.c.h.b16 %v56
    %v191 = vunpack.c.l.b16 %v57
    %v192 = vunpack.c.h.b16 %v57
    %v193 = vunpack.c.l.b16 %v58
    %v194 = vunpack.c.h.b16 %v58
    %v195 = vunpack.c.l.b16 %v59
    %v196 = vunpack.c.h.b16 %v59
    %v197 = vunpack.c.l.b16 %v60
    %v198 = vunpack.c.h.b16 %v60
    %v199 = vunpack.c.l.b16 %v61
    %v200 = vunpack.c.h.b16 %v61
    %v201 = vunpack.c.l.b16 %v62
    %v202 = vunpack.c.h.b16 %v62
    %v203 = vunpack.c.l.b16 %v63
    %v204 = vunpack.c.h.b16 %v63
    %v205 = vunpack.c.l.b16 %v64
    %v206 = vunpack.c.h.b16 %v64
    %v207 = vunpack.c.l.b16 %v65
    %v208 = vunpack.c.h.b16 %v65
    %v209 = vunpack.c.l.b16 %v66
    %v210 = vunpack.c.h.b16 %v66
    %v211 = vunpack.c.l.b16 %v67
    %v212 = vunpack.c.h.b16 %v67
    %v213 = vunpack.c.l.b16 %v68
    %v214 = vunpack.c.h.b16 %v68
    %v215 = vunpack.c.l.b16 %v69
    %v216 = vunpack.c.h.b16 %v69
    %v217 = vunpack.c.l.b16 %v70
    %v218 = vunpack.c.h.b16 %v70
    %v219 = vpack.c.b16 %v159, %v155
    %v220 = vpack.c.b16 %v160, %v156
    %v221 = vpack.c.b16 %v161, %v157
    %v222 = vpack.c.b16 %v162, %v158
    %v223 = vpack.c.b16 %v167, %v163
    %v224 = vpack.c.b16 %v168, %v164
    %v225 = vpack.c.b16 %v169, %v165
    %v226 = vpack.c.b16 %v170, %v166
    %v227 = vpack.c.b16 %v175, %v171
    %v228 = vpack.c.b16 %v176, %v172
    %v229 = vpack.c.b16 %v177, %v173
    %v230 = vpack.c.b16 %v178, %v174
    %v231 = vpack.c.b16 %v183, %v179
    %v232 = vpack.c.b16 %v184, %v180
    %v233 = vpack.c.b16 %v185, %v181
    %v234 = vpack.c.b16 %v186, %v182
    %v235 = vpack.c.b16 %v191, %v187
    %v236 = vpack.c.b16 %v192, %v188
    %v237 = vpack.c.b16 %v193, %v189
    %v238 = vpack.c.b16 %v194, %v190
    %v239 = vpack.c.b16 %v199, %v195
    %v240 = vpack.c.b16 %v200, %v196
    %v241 = vpack.c.b16 %v201, %v197
    %v242 = vpack.c.b16 %v202, %v198
    %v243 = vpack.c.b16 %v207, %v203
    %v244 = vpack.c.b16 %v208, %v204
    %v245 = vpack.c.b16 %v209, %v205
    %v246 = vpack.c.b16 %v210, %v206
    %v247 = vpack.c.b16 %v215, %v211
    %v248 = vpack.c.b16 %v216, %v212
    %v249 = vpack.c.b16 %v217, %v213
    %v250 = vpack.c.b16 %v218, %v214
    %283 = vmatprep.subr.bf16.mxu0 %v220
    %284 = vmatpush1.bf16.msra.mxu0 %v219
    %285 = vmatprep.subr.bf16.mxu0 %v224
    %286 = vmatpush1.bf16.msra.mxu0 %v223
    %287 = vmatprep.subr.bf16.mxu0 %v228
    %288 = vmatpush1.bf16.msra.mxu0 %v227
    %289 = vmatprep.subr.bf16.mxu0 %v232
    %290 = vmatpush1.bf16.msra.mxu0 %v231
    %291 = vmatprep.subr.bf16.mxu0 %v236
    %292 = vmatpush1.bf16.msra.mxu0 %v235
    %293 = vmatprep.subr.bf16.mxu0 %v240
    %294 = vmatpush1.bf16.msra.mxu0 %v239
    %295 = vmatprep.subr.bf16.mxu0 %v244
    %296 = vmatpush1.bf16.msra.mxu0 %v243
    %297 = vmatprep.subr.bf16.mxu0 %v248
    %298 = vmatpush1.bf16.msra.mxu0 %v247
    %299 = vmatprep.subr.bf16.mxu0 0
    %300 = vmatpush1.bf16.msra.mxu0 0
    %301 = vmatprep.subr.bf16.mxu0 0
    %302 = vmatpush1.bf16.msra.mxu0 0
    %303 = vmatprep.subr.bf16.mxu0 0
    %304 = vmatpush1.bf16.msra.mxu0 0
    %305 = vmatprep.subr.bf16.mxu0 0
    %306 = vmatpush1.bf16.msra.mxu0 0
    %307 = vmatprep.subr.bf16.mxu0 0
    %308 = vmatpush1.bf16.msra.mxu0 0
    %309 = vmatprep.subr.bf16.mxu0 0
    %310 = vmatpush1.bf16.msra.mxu0 0
    %311 = vmatprep.subr.bf16.mxu0 0
    %312 = vmatpush1.bf16.msra.mxu0 0
    %313 = vmatprep.subr.bf16.mxu0 0
    %314 = vmatpush1.bf16.msra.mxu0 0
    %315 = vmatprep.mubr.bf16.mxu0 0
    %316 = vmatmul.mubr.bf16.gmra.mrb[0].mxu0 %v121
    %v317 = vpop.f32.mrb[0].mxu0
    %v318 = vadd.f32 %v110, %v317
    %v319 = vpop.f32.mrb[0].mxu0
    %v320 = vadd.f32 %v110, %v319
    %v321 = vpop.f32.mrb[0].mxu0
    %v322 = vadd.f32 %v115, %v321
    %v323 = vpop.f32.mrb[0].mxu0
    %v324 = vadd.f32 %v115, %v323
    %325 = vdwg.mxu0
    %326 = vmatprep.subr.bf16.mxu0 %v222
    %327 = vmatpush1.bf16.msra.mxu0 %v221
    %328 = vmatprep.subr.bf16.mxu0 %v226
    %329 = vmatpush1.bf16.msra.mxu0 %v225
    %330 = vmatprep.subr.bf16.mxu0 %v230
    %331 = vmatpush1.bf16.msra.mxu0 %v229
    %332 = vmatprep.subr.bf16.mxu0 %v234
    %333 = vmatpush1.bf16.msra.mxu0 %v233
    %334 = vmatprep.subr.bf16.mxu0 %v238
    %335 = vmatpush1.bf16.msra.mxu0 %v237
    %336 = vmatprep.subr.bf16.mxu0 %v242
    %337 = vmatpush1.bf16.msra.mxu0 %v241
    %338 = vmatprep.subr.bf16.mxu0 %v246
    %339 = vmatpush1.bf16.msra.mxu0 %v245
    %340 = vmatprep.subr.bf16.mxu0 %v250
    %341 = vmatpush1.bf16.msra.mxu0 %v249
    %342 = vmatprep.subr.bf16.mxu0 0
    %343 = vmatpush1.bf16.msra.mxu0 0
    %344 = vmatprep.subr.bf16.mxu0 0
    %345 = vmatpush1.bf16.msra.mxu0 0
    %346 = vmatprep.subr.bf16.mxu0 0
    %347 = vmatpush1.bf16.msra.mxu0 0
    %348 = vmatprep.subr.bf16.mxu0 0
    %349 = vmatpush1.bf16.msra.mxu0 0
    %350 = vmatprep.subr.bf16.mxu0 0
    %351 = vmatpush1.bf16.msra.mxu0 0
    %352 = vmatprep.subr.bf16.mxu0 0
    %353 = vmatpush1.bf16.msra.mxu0 0
    %354 = vmatprep.subr.bf16.mxu0 0
    %355 = vmatpush1.bf16.msra.mxu0 0
    %356 = vmatprep.subr.bf16.mxu0 0
    %357 = vmatpush1.bf16.msra.mxu0 0
    %358 = vmatprep.mubr.bf16.mxu0 0
    %359 = vmatmul.mubr.bf16.gmra.mrb[0].mxu0 %v121
    %v360 = vpop.f32.mrb[0].mxu0
    %v361 = vadd.f32 %v110, %v360
    %v362 = vpop.f32.mrb[0].mxu0
    %v363 = vadd.f32 %v110, %v362
    %v364 = vpop.f32.mrb[0].mxu0
    %v365 = vadd.f32 %v115, %v364
    %v366 = vpop.f32.mrb[0].mxu0
    %v367 = vadd.f32 %v115, %v366
    %368 = vdwg.mxu0
    %v369 = vld [vmem:[%s2] sm:$0xf]
    %v370 = vld [vmem:[%s2 + $0x4] sm:$0xf]
    %v373 = vunpack.c.l.b16 %v369
    %v374 = vunpack.c.l.b16 %v370
    %v375 = vpack.c.b16 %v374, %v373
    %v409 = vunpack.c.l.b16 %v71
    %v410 = vunpack.c.h.b16 %v71
    %v411 = vunpack.c.l.b16 %v72
    %v412 = vunpack.c.h.b16 %v72
    %v413 = vunpack.c.l.b16 %v73
    %v414 = vunpack.c.h.b16 %v73
    %v415 = vunpack.c.l.b16 %v74
    %v416 = vunpack.c.h.b16 %v74
    %v417 = vunpack.c.l.b16 %v75
    %v418 = vunpack.c.h.b16 %v75
    %v419 = vunpack.c.l.b16 %v76
    %v420 = vunpack.c.h.b16 %v76
    %v421 = vunpack.c.l.b16 %v77
    %v422 = vunpack.c.h.b16 %v77
    %v423 = vunpack.c.l.b16 %v78
    %v424 = vunpack.c.h.b16 %v78
    %v425 = vunpack.c.l.b16 %v79
    %v426 = vunpack.c.h.b16 %v79
    %v427 = vunpack.c.l.b16 %v80
    %v428 = vunpack.c.h.b16 %v80
    %v429 = vunpack.c.l.b16 %v81
    %v430 = vunpack.c.h.b16 %v81
    %v431 = vunpack.c.l.b16 %v82
    %v432 = vunpack.c.h.b16 %v82
    %v433 = vunpack.c.l.b16 %v83
    %v434 = vunpack.c.h.b16 %v83
    %v435 = vunpack.c.l.b16 %v84
    %v436 = vunpack.c.h.b16 %v84
    %v437 = vunpack.c.l.b16 %v85
    %v438 = vunpack.c.h.b16 %v85
    %v439 = vunpack.c.l.b16 %v86
    %v440 = vunpack.c.h.b16 %v86
    %v441 = vunpack.c.l.b16 %v87
    %v442 = vunpack.c.h.b16 %v87
    %v443 = vunpack.c.l.b16 %v88
    %v444 = vunpack.c.h.b16 %v88
    %v445 = vunpack.c.l.b16 %v89
    %v446 = vunpack.c.h.b16 %v89
    %v447 = vunpack.c.l.b16 %v90
    %v448 = vunpack.c.h.b16 %v90
    %v449 = vunpack.c.l.b16 %v91
    %v450 = vunpack.c.h.b16 %v91
    %v451 = vunpack.c.l.b16 %v92
    %v452 = vunpack.c.h.b16 %v92
    %v453 = vunpack.c.l.b16 %v93
    %v454 = vunpack.c.h.b16 %v93
    %v455 = vunpack.c.l.b16 %v94
    %v456 = vunpack.c.h.b16 %v94
    %v457 = vunpack.c.l.b16 %v95
    %v458 = vunpack.c.h.b16 %v95
    %v459 = vunpack.c.l.b16 %v96
    %v460 = vunpack.c.h.b16 %v96
    %v461 = vunpack.c.l.b16 %v97
    %v462 = vunpack.c.h.b16 %v97
    %v463 = vunpack.c.l.b16 %v98
    %v464 = vunpack.c.h.b16 %v98
    %v465 = vunpack.c.l.b16 %v99
    %v466 = vunpack.c.h.b16 %v99
    %v467 = vunpack.c.l.b16 %v100
    %v468 = vunpack.c.h.b16 %v100
    %v469 = vunpack.c.l.b16 %v101
    %v470 = vunpack.c.h.b16 %v101
    %v471 = vunpack.c.l.b16 %v102
    %v472 = vunpack.c.h.b16 %v102
    %v473 = vpack.c.b16 %v413, %v409
    %v474 = vpack.c.b16 %v414, %v410
    %v475 = vpack.c.b16 %v415, %v411
    %v476 = vpack.c.b16 %v416, %v412
    %v477 = vpack.c.b16 %v421, %v417
    %v478 = vpack.c.b16 %v422, %v418
    %v479 = vpack.c.b16 %v423, %v419
    %v480 = vpack.c.b16 %v424, %v420
    %v481 = vpack.c.b16 %v429, %v425
    %v482 = vpack.c.b16 %v430, %v426
    %v483 = vpack.c.b16 %v431, %v427
    %v484 = vpack.c.b16 %v432, %v428
    %v485 = vpack.c.b16 %v437, %v433
    %v486 = vpack.c.b16 %v438, %v434
    %v487 = vpack.c.b16 %v439, %v435
    %v488 = vpack.c.b16 %v440, %v436
    %v489 = vpack.c.b16 %v445, %v441
    %v490 = vpack.c.b16 %v446, %v442
    %v491 = vpack.c.b16 %v447, %v443
    %v492 = vpack.c.b16 %v448, %v444
    %v493 = vpack.c.b16 %v453, %v449
    %v494 = vpack.c.b16 %v454, %v450
    %v495 = vpack.c.b16 %v455, %v451
    %v496 = vpack.c.b16 %v456, %v452
    %v497 = vpack.c.b16 %v461, %v457
    %v498 = vpack.c.b16 %v462, %v458
    %v499 = vpack.c.b16 %v463, %v459
    %v500 = vpack.c.b16 %v464, %v460
    %v501 = vpack.c.b16 %v469, %v465
    %v502 = vpack.c.b16 %v470, %v466
    %v503 = vpack.c.b16 %v471, %v467
    %v504 = vpack.c.b16 %v472, %v468
    %537 = vmatprep.subr.bf16.mxu0 %v474
    %538 = vmatpush1.bf16.msra.mxu0 %v473
    %539 = vmatprep.subr.bf16.mxu0 %v478
    %540 = vmatpush1.bf16.msra.mxu0 %v477
    %541 = vmatprep.subr.bf16.mxu0 %v482
    %542 = vmatpush1.bf16.msra.mxu0 %v481
    %543 = vmatprep.subr.bf16.mxu0 %v486
    %544 = vmatpush1.bf16.msra.mxu0 %v485
    %545 = vmatprep.subr.bf16.mxu0 %v490
    %546 = vmatpush1.bf16.msra.mxu0 %v489
    %547 = vmatprep.subr.bf16.mxu0 %v494
    %548 = vmatpush1.bf16.msra.mxu0 %v493
    %549 = vmatprep.subr.bf16.mxu0 %v498
    %550 = vmatpush1.bf16.msra.mxu0 %v497
    %551 = vmatprep.subr.bf16.mxu0 %v502
    %552 = vmatpush1.bf16.msra.mxu0 %v501
    %553 = vmatprep.subr.bf16.mxu0 0
    %554 = vmatpush1.bf16.msra.mxu0 0
    %555 = vmatprep.subr.bf16.mxu0 0
    %556 = vmatpush1.bf16.msra.mxu0 0
    %557 = vmatprep.subr.bf16.mxu0 0
    %558 = vmatpush1.bf16.msra.mxu0 0
    %559 = vmatprep.subr.bf16.mxu0 0
    %560 = vmatpush1.bf16.msra.mxu0 0
    %561 = vmatprep.subr.bf16.mxu0 0
    %562 = vmatpush1.bf16.msra.mxu0 0
    %563 = vmatprep.subr.bf16.mxu0 0
    %564 = vmatpush1.bf16.msra.mxu0 0
    %565 = vmatprep.subr.bf16.mxu0 0
    %566 = vmatpush1.bf16.msra.mxu0 0
    %567 = vmatprep.subr.bf16.mxu0 0
    %568 = vmatpush1.bf16.msra.mxu0 0
    %569 = vmatprep.mubr.bf16.mxu0 0
    %570 = vmatmul.mubr.bf16.gmra.mrb[0].mxu0 %v375
    %v571 = vpop.f32.mrb[0].mxu0
    %v572 = vadd.f32 1e-16, %v571
    %v573 = vpop.f32.mrb[0].mxu0
    %v574 = vadd.f32 1e-16, %v573
    %v575 = vpop.f32.mrb[0].mxu0
    %v576 = vadd.f32 1e-16, %v575
    %v577 = vpop.f32.mrb[0].mxu0
    %v578 = vadd.f32 1e-16, %v577
    %579 = vdwg.mxu0
    %580 = vmatprep.subr.bf16.mxu0 %v476
    %581 = vmatpush1.bf16.msra.mxu0 %v475
    %582 = vmatprep.subr.bf16.mxu0 %v480
    %583 = vmatpush1.bf16.msra.mxu0 %v479
    %584 = vmatprep.subr.bf16.mxu0 %v484
    %585 = vmatpush1.bf16.msra.mxu0 %v483
    %586 = vmatprep.subr.bf16.mxu0 %v488
    %587 = vmatpush1.bf16.msra.mxu0 %v487
    %588 = vmatprep.subr.bf16.mxu0 %v492
    %589 = vmatpush1.bf16.msra.mxu0 %v491
    %590 = vmatprep.subr.bf16.mxu0 %v496
    %591 = vmatpush1.bf16.msra.mxu0 %v495
    %592 = vmatprep.subr.bf16.mxu0 %v500
    %593 = vmatpush1.bf16.msra.mxu0 %v499
    %594 = vmatprep.subr.bf16.mxu0 %v504
    %595 = vmatpush1.bf16.msra.mxu0 %v503
    %596 = vmatprep.subr.bf16.mxu0 0
    %597 = vmatpush1.bf16.msra.mxu0 0
    %598 = vmatprep.subr.bf16.mxu0 0
    %599 = vmatpush1.bf16.msra.mxu0 0
    %600 = vmatprep.subr.bf16.mxu0 0
    %601 = vmatpush1.bf16.msra.mxu0 0
    %602 = vmatprep.subr.bf16.mxu0 0
    %603 = vmatpush1.bf16.msra.mxu0 0
    %604 = vmatprep.subr.bf16.mxu0 0
    %605 = vmatpush1.bf16.msra.mxu0 0
    %606 = vmatprep.subr.bf16.mxu0 0
    %607 = vmatpush1.bf16.msra.mxu0 0
    %608 = vmatprep.subr.bf16.mxu0 0
    %609 = vmatpush1.bf16.msra.mxu0 0
    %610 = vmatprep.subr.bf16.mxu0 0
    %611 = vmatpush1.bf16.msra.mxu0 0
    %612 = vmatprep.mubr.bf16.mxu0 0
    %613 = vmatmul.mubr.bf16.gmra.mrb[0].mxu0 %v375
    %v614 = vpop.f32.mrb[0].mxu0
    %v615 = vadd.f32 1e-16, %v614
    %v616 = vpop.f32.mrb[0].mxu0
    %v617 = vadd.f32 1e-16, %v616
    %v618 = vpop.f32.mrb[0].mxu0
    %v619 = vadd.f32 1e-16, %v618
    %v620 = vpop.f32.mrb[0].mxu0
    %v621 = vadd.f32 1e-16, %v620
    %622 = vdwg.mxu0
    %v623 = vld [vmem:[%s4] sm:$0xff]
    %v624 = vld [vmem:[%s4 + $0x8] sm:$0xff]
    %626 = vset.pattern.permute.xlu0 0
    %627 = vperm.xlu0 %626, %v623
    %v628 = vpop.permute.xlu0 %627
    %631 = vset.pattern.permute.xlu0 0
    %632 = vperm.xlu0 %631, %v624
    %v633 = vpop.permute.xlu0 %632
    %v635 = vadd.f32 %v572, %v628
    %v636 = vadd.f32 %v574, %v628
    %v637 = vadd.f32 %v615, %v628
    %v638 = vadd.f32 %v617, %v628
    %v639 = vadd.f32 %v576, %v633
    %v640 = vadd.f32 %v578, %v633
    %v641 = vadd.f32 %v619, %v633
    %v642 = vadd.f32 %v621, %v633
    %v643 = vrsqrt.pop %v635
    %v644 = vmul.f32 %v635, %v643
    %vm645 = vcmp.eq.f32.partialorder %v635, inf
    %v646 = vsel %vm645, %v635, %v644
    %vm647 = vcmp.eq.f32.partialorder %v635, 0.0
    %v648 = vand.u32 %v635, 2147483648
    %v649 = vsel %vm647, %v648, %v646
    %v650 = vrsqrt.pop %v636
    %v651 = vmul.f32 %v636, %v650
    %vm652 = vcmp.eq.f32.partialorder %v636, inf
    %v653 = vsel %vm652, %v636, %v651
    %vm654 = vcmp.eq.f32.partialorder %v636, 0.0
    %v655 = vand.u32 %v636, 2147483648
    %v656 = vsel %vm654, %v655, %v653
    %v657 = vrsqrt.pop %v637
    %v658 = vmul.f32 %v637, %v657
    %vm659 = vcmp.eq.f32.partialorder %v637, inf
    %v660 = vsel %vm659, %v637, %v658
    %vm661 = vcmp.eq.f32.partialorder %v637, 0.0
    %v662 = vand.u32 %v637, 2147483648
    %v663 = vsel %vm661, %v662, %v660
    %v664 = vrsqrt.pop %v638
    %v665 = vmul.f32 %v638, %v664
    %vm666 = vcmp.eq.f32.partialorder %v638, inf
    %v667 = vsel %vm666, %v638, %v665
    %vm668 = vcmp.eq.f32.partialorder %v638, 0.0
    %v669 = vand.u32 %v638, 2147483648
    %v670 = vsel %vm668, %v669, %v667
    %v671 = vrsqrt.pop %v639
    %v672 = vmul.f32 %v639, %v671
    %vm673 = vcmp.eq.f32.partialorder %v639, inf
    %v674 = vsel %vm673, %v639, %v672
    %vm675 = vcmp.eq.f32.partialorder %v639, 0.0
    %v676 = vand.u32 %v639, 2147483648
    %v677 = vsel %vm675, %v676, %v674
    %v678 = vrsqrt.pop %v640
    %v679 = vmul.f32 %v640, %v678
    %vm680 = vcmp.eq.f32.partialorder %v640, inf
    %v681 = vsel %vm680, %v640, %v679
    %vm682 = vcmp.eq.f32.partialorder %v640, 0.0
    %v683 = vand.u32 %v640, 2147483648
    %v684 = vsel %vm682, %v683, %v681
    %v685 = vrsqrt.pop %v641
    %v686 = vmul.f32 %v641, %v685
    %vm687 = vcmp.eq.f32.partialorder %v641, inf
    %v688 = vsel %vm687, %v641, %v686
    %vm689 = vcmp.eq.f32.partialorder %v641, 0.0
    %v690 = vand.u32 %v641, 2147483648
    %v691 = vsel %vm689, %v690, %v688
    %v692 = vrsqrt.pop %v642
    %v693 = vmul.f32 %v642, %v692
    %vm694 = vcmp.eq.f32.partialorder %v642, inf
    %v695 = vsel %vm694, %v642, %v693
    %vm696 = vcmp.eq.f32.partialorder %v642, 0.0
    %v697 = vand.u32 %v642, 2147483648
    %v698 = vsel %vm696, %v697, %v695
    %v699 = vld [vmem:[%s5] sm:$0xff]
    %v700 = vld [vmem:[%s5 + $0x8] sm:$0xff]
    %v701 = vld [vmem:[%s5 + $0x10] sm:$0xff]
    %v702 = vld [vmem:[%s5 + $0x18] sm:$0xff]
    %v703 = vunpack.c.l.bf16 %v699
    %v704 = vunpack.c.h.bf16 %v699
    %v705 = vunpack.c.l.bf16 %v700
    %v706 = vunpack.c.h.bf16 %v700
    %v707 = vunpack.c.l.bf16 %v701
    %v708 = vunpack.c.h.bf16 %v701
    %v709 = vunpack.c.l.bf16 %v702
    %v710 = vunpack.c.h.bf16 %v702
    %v711 = vmul.f32 %v649, %v703
    %v712 = vmul.f32 %v656, %v704
    %v713 = vmul.f32 %v663, %v705
    %v714 = vmul.f32 %v670, %v706
    %v715 = vmul.f32 %v677, %v707
    %v716 = vmul.f32 %v684, %v708
    %v717 = vmul.f32 %v691, %v709
    %v718 = vmul.f32 %v698, %v710
    %v719 = vadd.f32 %v318, %v711
    %v720 = vadd.f32 %v320, %v712
    %v721 = vadd.f32 %v361, %v713
    %v722 = vadd.f32 %v363, %v714
    %v723 = vadd.f32 %v322, %v715
    %v724 = vadd.f32 %v324, %v716
    %v725 = vadd.f32 %v365, %v717
    %v726 = vadd.f32 %v367, %v718
    %727 = vst [vmem:[#allocation5] sm:$0xff] %v719
    %728 = vst [vmem:[#allocation5 + $0x8] sm:$0xff] %v720
    %729 = vst [vmem:[#allocation5 + $0x10] sm:$0xff] %v721
    %730 = vst [vmem:[#allocation5 + $0x18] sm:$0xff] %v722
    %731 = vst [vmem:[#allocation5 + $0x20] sm:$0xff] %v723
    %732 = vst [vmem:[#allocation5 + $0x28] sm:$0xff] %v724
    %733 = vst [vmem:[#allocation5 + $0x30] sm:$0xff] %v725
    %734 = vst [vmem:[#allocation5 + $0x38] sm:$0xff] %v726
    // Predicated region
    $region30: #{tpu_custom_call.1} parent=1 // pred_check
      _
    $region31: #{tpu_custom_call.1} parent=1 // pred_check_branch
      %736 = sbr.rel (0) target = $region33
    $region32: #{tpu_custom_call.1} parent=1 // pred_region
      %s738 = ssub.s32 1024, 1024
      %739 = vsyncadd [#allocation4], %s738
      %s740 = sshll.u32 [#allocation5], 4
      %s741 = int_to_ptr.vmem [resolvable:$true] %s740
      %746 = dma.vmem_to_hbm [thread:$0]  %s741, 1024, %s6, [#allocation4], 512, 512, 32
    $region33: #{tpu_custom_call.1} parent=1 // pred_fallthru
      _
    // Predicated region
    $region34: #{tpu_custom_call.1} parent=1 // pred_check
      _
    $region35: #{tpu_custom_call.1} parent=1 // pred_check_branch
      %748 = sbr.rel (0) target = $region37
    $region36: #{tpu_custom_call.1} parent=1 // pred_region
      %749 = dma.done [#allocation4], 1024
    $region37: #{tpu_custom_call.1} parent=1 // pred_fallthru
      _
    %750 = vsyncpa [#allocation3], 1
    %751 = vsyncpa [#allocation4], 1

</llo_original>
